<compile_context>
chip_gen: v6e
topology: v6e:2x2x1
jax: 0.10.0
libtpu: 0.0.40
codegen_flags: <defaults>
</compile_context>

<pallas_src>
import functools

import jax
import jax.numpy as jnp
from jax.experimental import pallas as pl
from jax.experimental.pallas import tpu as pltpu


def _round_up(x, m):
    return ((x + m - 1) // m) * m


def _vmem_capacity_bytes():
    # Trace-time hardware query; fall back to the smallest per-core VMEM (v7x: 64 MiB).
    try:
        info = pltpu.get_tpu_info()
        cap = getattr(info, "vmem_capacity_bytes", None)
        if cap:
            return int(cap)
    except Exception:
        pass
    return 64 << 20


def _ffn_kernel(x_ref, w1a_ref, w1g_ref, b1a_ref, b1g_ref, w2_ref, b2_ref,
                o_ref, acc_ref, *, use_tanh_gelu):
    # x_ref  : [TM, dim_p]     bf16
    # w1a_ref: [dim_p, TH]     bf16 (value half of the first Linear, hidden chunk h)
    # w1g_ref: [dim_p, TH]     bf16 (gate half)
    # b1a_ref: [1, TH] f32,  b1g_ref: [1, TH] f32
    # w2_ref : [TH, dim_p]     bf16,  b2_ref: [1, dim_p] f32
    # acc_ref: [TM, dim_p]     f32 scratch accumulator (lives across hidden chunks)
    h = pl.program_id(1)

    @pl.when(h == 0)
    def _():
        # Fold the output bias into the accumulator init (added once, not per chunk).
        acc_ref[...] = jnp.broadcast_to(b2_ref[...], acc_ref.shape)

    x = x_ref[...]
    a = jnp.dot(x, w1a_ref[...], preferred_element_type=jnp.float32) + b1a_ref[...]
    g = jnp.dot(x, w1g_ref[...], preferred_element_type=jnp.float32) + b1g_ref[...]

    if use_tanh_gelu:
        # tanh approximation rides the EUP slot (cheaper, slight numeric deviation).
        gelu_g = jax.nn.gelu(g, approximate=True)
    else:
        # Exact erf-based GELU, matching torch.nn.functional.gelu default.
        gelu_g = 0.5 * g * (1.0 + jax.lax.erf(g * jnp.float32(0.7071067811865476)))

    inter = (a * gelu_g).astype(w2_ref.dtype)  # bf16 [TM, TH]
    acc_ref[...] += jnp.dot(inter, w2_ref[...], preferred_element_type=jnp.float32)

    @pl.when(h == pl.num_programs(1) - 1)
    def _():
        o_ref[...] = acc_ref[...].astype(o_ref.dtype)
    # TODO(synk): Dropout(p=0.0) is an identity at inference; no kernel-side RNG needed.


@functools.partial(
    jax.jit, static_argnames=("tm", "th", "vmem_limit_bytes", "use_tanh_gelu")
)
def feed_forward(x, w1, b1, w2, b2, *, tm=512, th=None, vmem_limit_bytes=None,
                 use_tanh_gelu=False):
    """x: [N, dim]. w1: [dim, 2*hidden], b1: [2*hidden], w2: [hidden, dim], b2: [dim].

    Returns [N, dim] in x.dtype. Matmuls run with bf16 operands / f32 accumulation.
    """
    N, dim = x.shape
    two_hidden = w1.shape[1]
    hidden = two_hidden // 2
    assert w2.shape == (hidden, dim)
    out_dtype = x.dtype

    # --- generation-aware VMEM budget (v5e/v6e: ~96 MiB, v7x: ~48 MiB) ---------------
    if vmem_limit_bytes is None:
        vmem_limit_bytes = min(_vmem_capacity_bytes() * 3 // 4, 100 << 20)

    # --- lane-dense feature axes: pad dim / hidden to multiples of 128 when needed ---
    dim_p = _round_up(dim, 128)
    hidden_p = _round_up(hidden, 128)

    w1_a = w1[:, :hidden]
    w1_g = w1[:, hidden:]
    b1_a = b1[:hidden]
    b1_g = b1[hidden:]

    if dim_p != dim:
        x = jnp.pad(x, ((0, 0), (0, dim_p - dim)))
        w1_a = jnp.pad(w1_a, ((0, dim_p - dim), (0, 0)))
        w1_g = jnp.pad(w1_g, ((0, dim_p - dim), (0, 0)))
        w2 = jnp.pad(w2, ((0, 0), (0, dim_p - dim)))
        b2 = jnp.pad(b2, ((0, dim_p - dim),))
    if hidden_p != hidden:
        w1_a = jnp.pad(w1_a, ((0, 0), (0, hidden_p - hidden)))
        w1_g = jnp.pad(w1_g, ((0, 0), (0, hidden_p - hidden)))
        b1_a = jnp.pad(b1_a, ((0, hidden_p - hidden),))
        b1_g = jnp.pad(b1_g, ((0, hidden_p - hidden),))
        w2 = jnp.pad(w2, ((0, hidden_p - hidden), (0, 0)))

    # --- bf16 MXU operands; biases stay f32 (added after f32 accumulation) -----------
    x_bf = x.astype(jnp.bfloat16)
    w1_a = w1_a.astype(jnp.bfloat16)
    w1_g = w1_g.astype(jnp.bfloat16)
    w2_bf = w2.astype(jnp.bfloat16)
    b1_a = b1_a.astype(jnp.float32).reshape(1, hidden_p)
    b1_g = b1_g.astype(jnp.float32).reshape(1, hidden_p)
    b2_2d = b2.astype(jnp.float32).reshape(1, dim_p)

    # --- token tile: multiple of 8 sublanes; >=2 grid steps so megacore can shard ----
    # (tm default 512 = multiple of 256 -> full MXU passes on v6e/v7x, 128 on v5e.)
    tm_eff = min(tm, _round_up(max(N, 8), 8))
    if N > 8 and pl.cdiv(N, tm_eff) < 2:
        tm_eff = _round_up(pl.cdiv(N, 2), 8)
    n_tok_tiles = pl.cdiv(N, tm_eff)  # ragged tail block handled by masked write-back

    # --- hidden chunk: bound per-step weight working set + intermediates -------------
    bf16_bytes = 2
    if th is None:
        bytes_per_hidden = 3 * dim_p * bf16_bytes  # w1a col + w1g col + w2 row
        th_eff = (vmem_limit_bytes * 2 // 5) // (2 * bytes_per_hidden)
        th_eff = max(128, min(2048, (th_eff // 128) * 128, hidden_p))
    else:
        th_eff = max(128, min((th // 128) * 128, hidden_p))
    while hidden_p % th_eff != 0:  # hidden chunks must tile hidden_p exactly
        th_eff -= 128
    n_h = hidden_p // th_eff

    # Weights/biases are block-invariant when there is a single hidden chunk: no point
    # double-buffering them. When the hidden axis actually tiles them, keep 2 buffers
    # so the next chunk's DMA overlaps compute.
    wt_buf = pl.Buffered(1) if n_h == 1 else pl.Buffered(2)

    # --- advisory cost hint for XLA's scheduler ---------------------------------------
    flops = 2 * N * dim_p * (2 * hidden_p) + 2 * N * hidden_p * dim_p
    bytes_accessed = (
        bf16_bytes * N * dim_p                      # x in (bf16)
        + bf16_bytes * 3 * dim_p * hidden_p         # w1a + w1g + w2 (bf16)
        + 4 * (2 * hidden_p + dim_p)                # biases (f32)
        + jnp.dtype(out_dtype).itemsize * N * dim_p  # out
    )
    cost = pl.CostEstimate(
        flops=flops, transcendentals=N * hidden_p, bytes_accessed=bytes_accessed
    )

    out = pl.pallas_call(
        functools.partial(_ffn_kernel, use_tanh_gelu=use_tanh_gelu),
        out_shape=jax.ShapeDtypeStruct((N, dim_p), out_dtype),
        grid_spec=pltpu.PrefetchScalarGridSpec(
            num_scalar_prefetch=0,
            grid=(n_tok_tiles, n_h),
            in_specs=[
                pl.BlockSpec((tm_eff, dim_p), lambda i, h: (i, 0)),          # x tile
                pl.BlockSpec((dim_p, th_eff), lambda i, h: (0, h),
                             pipeline_mode=wt_buf),                          # w1 value half
                pl.BlockSpec((dim_p, th_eff), lambda i, h: (0, h),
                             pipeline_mode=wt_buf),                          # w1 gate half
                pl.BlockSpec((1, th_eff), lambda i, h: (0, h),
                             pipeline_mode=wt_buf),                          # b1 value half
                pl.BlockSpec((1, th_eff), lambda i, h: (0, h),
                             pipeline_mode=wt_buf),                          # b1 gate half
                pl.BlockSpec((th_eff, dim_p), lambda i, h: (h, 0),
                             pipeline_mode=wt_buf),                          # w2
                pl.BlockSpec((1, dim_p), lambda i, h: (0, 0),
                             pipeline_mode=pl.Buffered(1)),                  # b2 (constant)
            ],
            out_specs=pl.BlockSpec((tm_eff, dim_p), lambda i, h: (i, 0)),
            scratch_shapes=[pltpu.VMEM((tm_eff, dim_p), jnp.float32)],        # accumulator
        ),
        compiler_params=pltpu.CompilerParams(
            dimension_semantics=("parallel", "arbitrary"),  # tokens parallel, hidden reduce
            vmem_limit_bytes=int(vmem_limit_bytes),
        ),
        cost_estimate=cost,
    )(x_bf, w1_a, w1_g, b1_a, b1_g, w2_bf, b2_2d)

    return out if dim_p == dim else out[:, :dim]


if __name__ == "__main__":
    # Small shapes consistent with FeedForward(dim=32, mult=4):
    # Linear(32 -> 256) -> GEGLU (chunk 128 | 128) -> Linear(128 -> 32) -> Dropout(0)
    batch, seq, dim, mult = 2, 8, 32, 4
    hidden = dim * mult

    key = jax.random.PRNGKey(0)
    k_x, k_w1, k_b1, k_w2, k_b2 = jax.random.split(key, 5)

    x = jax.random.normal(k_x, (batch, seq, dim), dtype=jnp.float32)
    # Deterministic parameter init (scaled normals, stand-in for nn.Linear init).
    w1 = jax.random.normal(k_w1, (dim, hidden * 2), dtype=jnp.float32) * (1.0 / dim ** 0.5)
    b1 = jax.random.normal(k_b1, (hidden * 2,), dtype=jnp.float32) * 0.01
    w2 = jax.random.normal(k_w2, (hidden, dim), dtype=jnp.float32) * (1.0 / hidden ** 0.5)
    b2 = jax.random.normal(k_b2, (dim,), dtype=jnp.float32) * 0.01

    # Flatten leading dims -> [N, dim] for the kernel, then restore shape.
    x2d = x.reshape(batch * seq, dim)
    out2d = feed_forward(x2d, w1, b1, w2, b2)
    out = out2d.reshape(batch, seq, dim)
    jax.block_until_ready(out)

    # Pure-JAX f32 reference (same math as the PyTorch module). Kernel uses bf16 MXU
    # operands with f32 accumulation, so tolerances are loosened accordingly.
    h_ref = x2d @ w1 + b1
    a_ref, g_ref = h_ref[:, :hidden], h_ref[:, hidden:]
    gelu_ref = 0.5 * g_ref * (1.0 + jax.lax.erf(g_ref / jnp.sqrt(2.0)))
    ref = ((a_ref * gelu_ref) @ w2 + b2).reshape(batch, seq, dim)
    assert jnp.allclose(out, ref, atol=5e-2, rtol=5e-2), "mismatch vs reference"

    print("KERNEL_OK")
</pallas_src>

<mosaic_0001>
module attributes {stable_mosaic.version = 11 : i64} {
  func.func @_ffn_kernel(%arg0: i32, %arg1: i32, %arg2: memref<8x128xbf16, #tpu.memory_space<vmem>>, %arg3: memref<128x128xbf16, #tpu.memory_space<vmem>>, %arg4: memref<128x128xbf16, #tpu.memory_space<vmem>>, %arg5: memref<1x128xf32, #tpu.memory_space<vmem>>, %arg6: memref<1x128xf32, #tpu.memory_space<vmem>>, %arg7: memref<128x128xbf16, #tpu.memory_space<vmem>>, %arg8: memref<1x128xf32, #tpu.memory_space<vmem>>, %arg9: memref<8x128xf32, #tpu.memory_space<vmem>>, %arg10: memref<8x128xf32, #tpu.memory_space<vmem>>) attributes {dimension_semantics = [#tpu.dimension_semantics<parallel>, #tpu.dimension_semantics<arbitrary>], iteration_bounds = array<i64: 2, 1>, scalar_prefetch = 0 : i64, scratch_operands = 1 : i64, tpu.core_type = #tpu.core_type<tc>, window_params = [{transform_indices = @transform_0, window_bounds = array<i64: 8, 128>}, {pipeline_mode = #tpu.pipeline_mode<synchronous>, transform_indices = @transform_1, window_bounds = array<i64: 128, 128>}, {pipeline_mode = #tpu.pipeline_mode<synchronous>, transform_indices = @transform_2, window_bounds = array<i64: 128, 128>}, {pipeline_mode = #tpu.pipeline_mode<synchronous>, transform_indices = @transform_3, window_bounds = array<i64: 1, 128>}, {pipeline_mode = #tpu.pipeline_mode<synchronous>, transform_indices = @transform_4, window_bounds = array<i64: 1, 128>}, {pipeline_mode = #tpu.pipeline_mode<synchronous>, transform_indices = @transform_5, window_bounds = array<i64: 128, 128>}, {pipeline_mode = #tpu.pipeline_mode<synchronous>, transform_indices = @transform_6, window_bounds = array<i64: 1, 128>}, {transform_indices = @transform_7, window_bounds = array<i64: 8, 128>}]} {
    %c0_i32 = arith.constant 0 : i32
    %0 = arith.cmpi eq, %arg1, %c0_i32 : i32
    %1 = arith.extui %0 : i1 to i32
    %c0_i32_0 = arith.constant 0 : i32
    %2 = arith.cmpi ne, %1, %c0_i32_0 : i32
    scf.if %2 {
      %c0_23 = arith.constant 0 : index
      %c0_24 = arith.constant 0 : index
      %32 = vector.load %arg8[%c0_23, %c0_24] : memref<1x128xf32, #tpu.memory_space<vmem>>, vector<1x128xf32>
      %33 = vector.shape_cast %32 : vector<1x128xf32> to vector<1x128xf32>
      %34 = vector.broadcast %33 : vector<1x128xf32> to vector<8x128xf32>
      %c0_25 = arith.constant 0 : index
      %c0_26 = arith.constant 0 : index
      %35 = vector.load %arg10[%c0_25, %c0_26] : memref<8x128xf32, #tpu.memory_space<vmem>>, vector<8x128xf32>
      tpu.vector_store %arg10[%c0_25, %c0_26], %34 {strides = array<i32>} : memref<8x128xf32, #tpu.memory_space<vmem>>, vector<8x128xf32>,
    } else {
    }
    %c0 = arith.constant 0 : index
    %c0_1 = arith.constant 0 : index
    %3 = vector.load %arg2[%c0, %c0_1] : memref<8x128xbf16, #tpu.memory_space<vmem>>, vector<8x128xbf16>
    %c0_2 = arith.constant 0 : index
    %c0_3 = arith.constant 0 : index
    %4 = vector.load %arg3[%c0_2, %c0_3] : memref<128x128xbf16, #tpu.memory_space<vmem>>, vector<128x128xbf16>
    %cst = arith.constant dense<0.000000e+00> : vector<8x128xf32>
    %5 = tpu.matmul %3, %4, %cst {dimension_numbers = #tpu.dot_dimension_numbers<[1], [0], [0], [1], [0, 0, 1, 1], [], []>} : vector<8x128xbf16>, vector<128x128xbf16>, vector<8x128xf32> -> vector<8x128xf32>
    %c0_4 = arith.constant 0 : index
    %c0_5 = arith.constant 0 : index
    %6 = vector.load %arg5[%c0_4, %c0_5] : memref<1x128xf32, #tpu.memory_space<vmem>>, vector<1x128xf32>
    %7 = vector.broadcast %6 : vector<1x128xf32> to vector<8x128xf32>
    %8 = arith.addf %5, %7 : vector<8x128xf32>
    %c0_6 = arith.constant 0 : index
    %c0_7 = arith.constant 0 : index
    %9 = vector.load %arg4[%c0_6, %c0_7] : memref<128x128xbf16, #tpu.memory_space<vmem>>, vector<128x128xbf16>
    %cst_8 = arith.constant dense<0.000000e+00> : vector<8x128xf32>
    %10 = tpu.matmul %3, %9, %cst_8 {dimension_numbers = #tpu.dot_dimension_numbers<[1], [0], [0], [1], [0, 0, 1, 1], [], []>} : vector<8x128xbf16>, vector<128x128xbf16>, vector<8x128xf32> -> vector<8x128xf32>
    %c0_9 = arith.constant 0 : index
    %c0_10 = arith.constant 0 : index
    %11 = vector.load %arg6[%c0_9, %c0_10] : memref<1x128xf32, #tpu.memory_space<vmem>>, vector<1x128xf32>
    %12 = vector.broadcast %11 : vector<1x128xf32> to vector<8x128xf32>
    %13 = arith.addf %10, %12 : vector<8x128xf32>
    %cst_11 = arith.constant 5.000000e-01 : f32
    %14 = vector.broadcast %cst_11 : f32 to vector<8x128xf32>
    %15 = arith.mulf %14, %13 : vector<8x128xf32>
    %cst_12 = arith.constant 0.707106769 : f32
    %16 = vector.broadcast %cst_12 : f32 to vector<8x128xf32>
    %17 = arith.mulf %13, %16 : vector<8x128xf32>
    %18 = math.erf %17 : vector<8x128xf32>
    %cst_13 = arith.constant 1.000000e+00 : f32
    %19 = vector.broadcast %cst_13 : f32 to vector<8x128xf32>
    %20 = arith.addf %19, %18 : vector<8x128xf32>
    %21 = arith.mulf %15, %20 : vector<8x128xf32>
    %22 = arith.mulf %8, %21 : vector<8x128xf32>
    %23 = arith.truncf %22 : vector<8x128xf32> to vector<8x128xbf16>
    %c0_14 = arith.constant 0 : index
    %c0_15 = arith.constant 0 : index
    %24 = vector.load %arg10[%c0_14, %c0_15] : memref<8x128xf32, #tpu.memory_space<vmem>>, vector<8x128xf32>
    %c0_16 = arith.constant 0 : index
    %c0_17 = arith.constant 0 : index
    %25 = vector.load %arg7[%c0_16, %c0_17] : memref<128x128xbf16, #tpu.memory_space<vmem>>, vector<128x128xbf16>
    %cst_18 = arith.constant dense<0.000000e+00> : vector<8x128xf32>
    %26 = tpu.matmul %23, %25, %cst_18 {dimension_numbers = #tpu.dot_dimension_numbers<[1], [0], [0], [1], [0, 0, 1, 1], [], []>} : vector<8x128xbf16>, vector<128x128xbf16>, vector<8x128xf32> -> vector<8x128xf32>
    %27 = arith.addf %24, %26 : vector<8x128xf32>
    %c0_19 = arith.constant 0 : index
    %c0_20 = arith.constant 0 : index
    %28 = vector.load %arg10[%c0_19, %c0_20] : memref<8x128xf32, #tpu.memory_space<vmem>>, vector<8x128xf32>
    tpu.vector_store %arg10[%c0_19, %c0_20], %27 {strides = array<i32>} : memref<8x128xf32, #tpu.memory_space<vmem>>, vector<8x128xf32>,
    %c0_i32_21 = arith.constant 0 : i32
    %29 = arith.cmpi eq, %arg1, %c0_i32_21 : i32
    %30 = arith.extui %29 : i1 to i32
    %c0_i32_22 = arith.constant 0 : i32
    %31 = arith.cmpi ne, %30, %c0_i32_22 : i32
    scf.if %31 {
      %c0_23 = arith.constant 0 : index
      %c0_24 = arith.constant 0 : index
      %32 = vector.load %arg10[%c0_23, %c0_24] : memref<8x128xf32, #tpu.memory_space<vmem>>, vector<8x128xf32>
      %c0_25 = arith.constant 0 : index
      %c0_26 = arith.constant 0 : index
      %33 = vector.load %arg9[%c0_25, %c0_26] : memref<8x128xf32, #tpu.memory_space<vmem>>, vector<8x128xf32>
      tpu.vector_store %arg9[%c0_25, %c0_26], %32 {strides = array<i32>} : memref<8x128xf32, #tpu.memory_space<vmem>>, vector<8x128xf32>,
    } else {
    }
    return
  }
  func.func @transform_0(%arg0: i32, %arg1: i32) -> (i32, i32) {
    %c0_i32 = arith.constant 0 : i32
    %c0_i32_0 = arith.constant 0 : i32
    return %arg0, %c0_i32 : i32, i32
  }
  func.func @transform_1(%arg0: i32, %arg1: i32) -> (i32, i32) {
    %c0_i32 = arith.constant 0 : i32
    %c0_i32_0 = arith.constant 0 : i32
    return %c0_i32, %arg1 : i32, i32
  }
  func.func @transform_2(%arg0: i32, %arg1: i32) -> (i32, i32) {
    %c0_i32 = arith.constant 0 : i32
    %c0_i32_0 = arith.constant 0 : i32
    return %c0_i32, %arg1 : i32, i32
  }
  func.func @transform_3(%arg0: i32, %arg1: i32) -> (i32, i32) {
    %c0_i32 = arith.constant 0 : i32
    %c0_i32_0 = arith.constant 0 : i32
    return %c0_i32, %arg1 : i32, i32
  }
  func.func @transform_4(%arg0: i32, %arg1: i32) -> (i32, i32) {
    %c0_i32 = arith.constant 0 : i32
    %c0_i32_0 = arith.constant 0 : i32
    return %c0_i32, %arg1 : i32, i32
  }
  func.func @transform_5(%arg0: i32, %arg1: i32) -> (i32, i32) {
    %c0_i32 = arith.constant 0 : i32
    %c0_i32_0 = arith.constant 0 : i32
    return %arg1, %c0_i32 : i32, i32
  }
  func.func @transform_6(%arg0: i32, %arg1: i32) -> (i32, i32) {
    %c0_i32 = arith.constant 0 : i32
    %c0_i32_0 = arith.constant 0 : i32
    %c0_i32_1 = arith.constant 0 : i32
    return %c0_i32, %c0_i32_0 : i32, i32
  }
  func.func @transform_7(%arg0: i32, %arg1: i32) -> (i32, i32) {
    %c0_i32 = arith.constant 0 : i32
    %c0_i32_0 = arith.constant 0 : i32
    return %arg0, %c0_i32 : i32, i32
  }
}

</mosaic_0001>

<llo_original>
// kernel: feed_forward.1
$region0: #{feed_forward.1}
  #allocation0 [shape = 'u32[]', space=smem, size = 0x4, offset = 0x4, fixed_abs, tag = 'smem constant byte address 0x4 - core index']
  #allocation1 [shape = 'u32[144,128]{1,0:T(1,128)}', space=vmem, size = 0x12000, scoped, tag = 'internal scratch']
  #allocation2 [shape = 'f32[8,128]{1,0:T(8,128)}', space=vmem, size = 0x1000, scoped, tag = 'scratch operand']
  %s0 = inlined_call_operand.vmem [shape: bf16[16,128], index: 0, kind: input, shape index: {}]
  %s1 = inlined_call_operand.vmem [shape: bf16[128,128], index: 1, kind: input, shape index: {}]
  %s2 = inlined_call_operand.vmem [shape: bf16[128,128], index: 2, kind: input, shape index: {}]
  %s3 = inlined_call_operand.vmem [shape: f32[1,128], index: 3, kind: input, shape index: {}]
  %s4 = inlined_call_operand.vmem [shape: f32[1,128], index: 4, kind: input, shape index: {}]
  %s5 = inlined_call_operand.vmem [shape: bf16[128,128], index: 5, kind: input, shape index: {}]
  %s6 = inlined_call_operand.vmem [shape: f32[1,128], index: 6, kind: input, shape index: {}]
  %s7 = inlined_call_operand.hbm [shape: f32[16,128], index: 7, kind: output, shape index: {}]
  %s8 = sld [smem:[#allocation0]]
  $region69: #{feed_forward.1} parent=0
    _
  %s10 = ssub.s32 1, %s8
  %s11 = scalar_select 0, %s10, %s8
  $region1: #{feed_forward.1} parent=0
    #allocation3 [shape = 'u8[8192]{0}', space=vmem, size = 0x2000, scoped, tag = 'output window, operand 0']
    #allocation4 [shape = 's32[2]{0}', space=sflag, size = 0x8, scoped, tag = 'scoped memory for feed_forward.1']
    %12 = vsyncpa [#allocation4], 0
    %s13 = scalar_lea.sflag [#allocation4], 1
    %14 = vsyncpa %s13, 0
    loop: start=0, step=1, limit=4
    $region2: #{feed_forward.1} parent=1 // loop_pre_header
      _
    $region3: #{feed_forward.1} parent=1 // loop_header
      %s16 = sphi 0, %s20
      %p17 = scmp.ge.s32.totalorder %s16, 4
      %s23 = sphi 0, %s35
      %s24 = sphi 0, %s31
      %s25 = sphi 0, %s23
      %s26 = sphi 0, %s24
      %s27 = sphi 0, %s25
      %s28 = sphi 0, %s26
      %s38 = sphi 0, %s40
      %s41 = sphi 0, %s38
      %s42 = sphi 0, %s41
      %s58 = sphi 0, %s42
      %s64 = sphi 0, %s66
      %s67 = sphi 0, %s64
      %s68 = sphi 0, %s67
      %s84 = sphi 0, %s68
      %s90 = sphi 0, %s92
      %s93 = sphi 0, %s90
      %s94 = sphi 0, %s93
      %s110 = sphi 0, %s94
      %s116 = sphi 0, %s118
      %s119 = sphi 0, %s116
      %s120 = sphi 0, %s119
      %s136 = sphi 0, %s120
      %s142 = sphi 0, %s144
      %s145 = sphi 0, %s142
      %s146 = sphi 0, %s145
      %s162 = sphi 0, %s146
      %s168 = sphi 0, %s170
      %s171 = sphi 0, %s168
      %s172 = sphi 0, %s171
      %s188 = sphi 0, %s172
      %s192 = sphi 0, %s192
      %s194 = sphi 0, %s192
      %s195 = sphi 0, %s194
      %s209 = sphi 0, %s195
      %s215 = sphi 0, %s217
      %s218 = sphi 0, %s215
      %s219 = sphi 0, %s218
      %s235 = sphi 0, %s219
    $region4: #{feed_forward.1} parent=1 // loop_header_branch
      %19 = sbr.rel (%p17) target = $region8
    $region5: #{feed_forward.1} parent=1 // loop_body
      %s21 = ssub.s32 %s16, 1
      %s22 = ssub.s32 %s16, 2
      %s29 = sadd.s32 1, %s24
      %p30 = scmp.ge.s32.totalorder %s29, 1
      %s31 = scalar_select %p30, 0, %s29
      %s32 = sadd.s32 1, %s23
      %s33 = scalar_select %p30, %s32, %s23
      %p34 = scmp.ge.s32.totalorder %s33, 2
      %s35 = scalar_select %p34, 0, %s33
      %s36 = ssub.s32 %s23, %s35
      %p37 = scmp.eq.s32.totalorder %s36, 0
      %s39 = sadd.s32 %s38, 1
      %s40 = scalar_select %p37, %s38, %s39
      %p43 = pneg %p37
      %p44 = scmp.eq.s32.totalorder %s16, 1
      %p45 = por %p43, %p44
      %p46 = scmp.ne.s32.totalorder %s38, %s41
      %p47 = scmp.eq.s32.totalorder %s16, 0
      %p48 = por %p46, %p47
      %p49 = scmp.ne.s32.totalorder %s38, %s41
      %p50 = scmp.eq.s32.totalorder %s21, 1
      %p51 = por %p49, %p50
      %p52 = scmp.ne.s32.totalorder %s41, %s42
      %p53 = scmp.eq.s32.totalorder %s21, 0
      %p54 = por %p52, %p53
      %p55 = scmp.ne.s32.totalorder %s41, %s42
      %p56 = scmp.eq.s32.totalorder %s22, 1
      %p57 = por %p55, %p56
      %p59 = scmp.ne.s32.totalorder %s42, %s58
      %p60 = scmp.eq.s32.totalorder %s22, 0
      %p61 = por %p59, %p60
      %s62 = ssub.s32 %s24, %s31
      %p63 = scmp.eq.s32.totalorder %s62, 0
      %s65 = sadd.s32 %s64, 1
      %s66 = scalar_select %p63, %s64, %s65
      %p69 = pneg %p63
      %p70 = scmp.eq.s32.totalorder %s16, 1
      %p71 = por %p69, %p70
      %p72 = scmp.ne.s32.totalorder %s64, %s67
      %p73 = scmp.eq.s32.totalorder %s16, 0
      %p74 = por %p72, %p73
      %p75 = scmp.ne.s32.totalorder %s64, %s67
      %p76 = scmp.eq.s32.totalorder %s21, 1
      %p77 = por %p75, %p76
      %p78 = scmp.ne.s32.totalorder %s67, %s68
      %p79 = scmp.eq.s32.totalorder %s21, 0
      %p80 = por %p78, %p79
      %p81 = scmp.ne.s32.totalorder %s67, %s68
      %p82 = scmp.eq.s32.totalorder %s22, 1
      %p83 = por %p81, %p82
      %p85 = scmp.ne.s32.totalorder %s68, %s84
      %p86 = scmp.eq.s32.totalorder %s22, 0
      %p87 = por %p85, %p86
      %s88 = ssub.s32 %s24, %s31
      %p89 = scmp.eq.s32.totalorder %s88, 0
      %s91 = sadd.s32 %s90, 1
      %s92 = scalar_select %p89, %s90, %s91
      %p95 = pneg %p89
      %p96 = scmp.eq.s32.totalorder %s16, 1
      %p97 = por %p95, %p96
      %p98 = scmp.ne.s32.totalorder %s90, %s93
      %p99 = scmp.eq.s32.totalorder %s16, 0
      %p100 = por %p98, %p99
      %p101 = scmp.ne.s32.totalorder %s90, %s93
      %p102 = scmp.eq.s32.totalorder %s21, 1
      %p103 = por %p101, %p102
      %p104 = scmp.ne.s32.totalorder %s93, %s94
      %p105 = scmp.eq.s32.totalorder %s21, 0
      %p106 = por %p104, %p105
      %p107 = scmp.ne.s32.totalorder %s93, %s94
      %p108 = scmp.eq.s32.totalorder %s22, 1
      %p109 = por %p107, %p108
      %p111 = scmp.ne.s32.totalorder %s94, %s110
      %p112 = scmp.eq.s32.totalorder %s22, 0
      %p113 = por %p111, %p112
      %s114 = ssub.s32 %s24, %s31
      %p115 = scmp.eq.s32.totalorder %s114, 0
      %s117 = sadd.s32 %s116, 1
      %s118 = scalar_select %p115, %s116, %s117
      %p121 = pneg %p115
      %p122 = scmp.eq.s32.totalorder %s16, 1
      %p123 = por %p121, %p122
      %p124 = scmp.ne.s32.totalorder %s116, %s119
      %p125 = scmp.eq.s32.totalorder %s16, 0
      %p126 = por %p124, %p125
      %p127 = scmp.ne.s32.totalorder %s116, %s119
      %p128 = scmp.eq.s32.totalorder %s21, 1
      %p129 = por %p127, %p128
      %p130 = scmp.ne.s32.totalorder %s119, %s120
      %p131 = scmp.eq.s32.totalorder %s21, 0
      %p132 = por %p130, %p131
      %p133 = scmp.ne.s32.totalorder %s119, %s120
      %p134 = scmp.eq.s32.totalorder %s22, 1
      %p135 = por %p133, %p134
      %p137 = scmp.ne.s32.totalorder %s120, %s136
      %p138 = scmp.eq.s32.totalorder %s22, 0
      %p139 = por %p137, %p138
      %s140 = ssub.s32 %s24, %s31
      %p141 = scmp.eq.s32.totalorder %s140, 0
      %s143 = sadd.s32 %s142, 1
      %s144 = scalar_select %p141, %s142, %s143
      %p147 = pneg %p141
      %p148 = scmp.eq.s32.totalorder %s16, 1
      %p149 = por %p147, %p148
      %p150 = scmp.ne.s32.totalorder %s142, %s145
      %p151 = scmp.eq.s32.totalorder %s16, 0
      %p152 = por %p150, %p151
      %p153 = scmp.ne.s32.totalorder %s142, %s145
      %p154 = scmp.eq.s32.totalorder %s21, 1
      %p155 = por %p153, %p154
      %p156 = scmp.ne.s32.totalorder %s145, %s146
      %p157 = scmp.eq.s32.totalorder %s21, 0
      %p158 = por %p156, %p157
      %p159 = scmp.ne.s32.totalorder %s145, %s146
      %p160 = scmp.eq.s32.totalorder %s22, 1
      %p161 = por %p159, %p160
      %p163 = scmp.ne.s32.totalorder %s146, %s162
      %p164 = scmp.eq.s32.totalorder %s22, 0
      %p165 = por %p163, %p164
      %s166 = ssub.s32 %s24, %s31
      %p167 = scmp.eq.s32.totalorder %s166, 0
      %s169 = sadd.s32 %s168, 1
      %s170 = scalar_select %p167, %s168, %s169
      %p173 = pneg %p167
      %p174 = scmp.eq.s32.totalorder %s16, 1
      %p175 = por %p173, %p174
      %p176 = scmp.ne.s32.totalorder %s168, %s171
      %p177 = scmp.eq.s32.totalorder %s16, 0
      %p178 = por %p176, %p177
      %p179 = scmp.ne.s32.totalorder %s168, %s171
      %p180 = scmp.eq.s32.totalorder %s21, 1
      %p181 = por %p179, %p180
      %p182 = scmp.ne.s32.totalorder %s171, %s172
      %p183 = scmp.eq.s32.totalorder %s21, 0
      %p184 = por %p182, %p183
      %p185 = scmp.ne.s32.totalorder %s171, %s172
      %p186 = scmp.eq.s32.totalorder %s22, 1
      %p187 = por %p185, %p186
      %p189 = scmp.ne.s32.totalorder %s172, %s188
      %p190 = scmp.eq.s32.totalorder %s22, 0
      %p191 = por %p189, %p190
      %s193 = sadd.s32 %s192, 1
      %p196 = scmp.eq.s32.totalorder %s16, 1
      %p197 = scmp.ne.s32.totalorder %s192, %s194
      %p198 = scmp.eq.s32.totalorder %s16, 0
      %p199 = por %p197, %p198
      %p200 = scmp.ne.s32.totalorder %s192, %s194
      %p201 = scmp.eq.s32.totalorder %s21, 1
      %p202 = por %p200, %p201
      %p203 = scmp.ne.s32.totalorder %s194, %s195
      %p204 = scmp.eq.s32.totalorder %s21, 0
      %p205 = por %p203, %p204
      %p206 = scmp.ne.s32.totalorder %s194, %s195
      %p207 = scmp.eq.s32.totalorder %s22, 1
      %p208 = por %p206, %p207
      %p210 = scmp.ne.s32.totalorder %s195, %s209
      %p211 = scmp.eq.s32.totalorder %s22, 0
      %p212 = por %p210, %p211
      %s213 = ssub.s32 %s23, %s35
      %p214 = scmp.eq.s32.totalorder %s213, 0
      %s216 = sadd.s32 %s215, 1
      %s217 = scalar_select %p214, %s215, %s216
      %p220 = pneg %p214
      %p221 = scmp.eq.s32.totalorder %s16, 1
      %p222 = por %p220, %p221
      %p223 = scmp.ne.s32.totalorder %s215, %s218
      %p224 = scmp.eq.s32.totalorder %s16, 0
      %p225 = por %p223, %p224
      %p226 = scmp.ne.s32.totalorder %s215, %s218
      %p227 = scmp.eq.s32.totalorder %s21, 1
      %p228 = por %p226, %p227
      %p229 = scmp.ne.s32.totalorder %s218, %s219
      %p230 = scmp.eq.s32.totalorder %s21, 0
      %p231 = por %p229, %p230
      %p232 = scmp.ne.s32.totalorder %s218, %s219
      %p233 = scmp.eq.s32.totalorder %s22, 1
      %p234 = por %p232, %p233
      %p236 = scmp.ne.s32.totalorder %s219, %s235
      %p237 = scmp.eq.s32.totalorder %s22, 0
      %p238 = por %p236, %p237
      %p239 = scmp.le.s32.totalorder 1, %s16
      %p240 = scmp.lt.s32.totalorder %s16, 3
      %p241 = pnand %p239, %p240
      %p242 = pneg %p241
      // Predicated region
      $region9: #{feed_forward.1} parent=5 // pred_check
        _
      $region10: #{feed_forward.1} parent=5 // pred_check_branch
        %244 = sbr.rel (%p241) target = $region12
      $region11: #{feed_forward.1} parent=5 // pred_region
        %s245 = ssub.s32 %s16, 1
        // Predicated region
        $region13: #{feed_forward.1} parent=11 // pred_check
          %p246 = pneg %p80
        $region14: #{feed_forward.1} parent=11 // pred_check_branch
          %248 = sbr.rel (%p246) target = $region16
        $region15: #{feed_forward.1} parent=11 // pred_region
          %p249 = scmp.lt.s32.totalorder %s26, 0
          %s250 = scalar_select %p249, %s26, 0
          %s251 = smul.addr %s250, 4
          %s252 = scalar_lea.vmem %s1, %s251
        $region16: #{feed_forward.1} parent=11 // pred_fallthru
          _
        // Predicated region
        $region17: #{feed_forward.1} parent=11 // pred_check
          %p253 = pneg %p106
        $region18: #{feed_forward.1} parent=11 // pred_check_branch
          %255 = sbr.rel (%p253) target = $region20
        $region19: #{feed_forward.1} parent=11 // pred_region
          %p256 = scmp.lt.s32.totalorder %s26, 0
          %s257 = scalar_select %p256, %s26, 0
          %s258 = smul.addr %s257, 4
          %s259 = scalar_lea.vmem %s2, %s258
        $region20: #{feed_forward.1} parent=11 // pred_fallthru
          _
        // Predicated region
        $region21: #{feed_forward.1} parent=11 // pred_check
          %p260 = pneg %p132
        $region22: #{feed_forward.1} parent=11 // pred_check_branch
          %262 = sbr.rel (%p260) target = $region24
        $region23: #{feed_forward.1} parent=11 // pred_region
          %p263 = scmp.lt.s32.totalorder %s26, 0
          %s264 = scalar_select %p263, %s26, 0
          %s265 = scalar_lea.vmem %s3, %s264
        $region24: #{feed_forward.1} parent=11 // pred_fallthru
          _
        // Predicated region
        $region25: #{feed_forward.1} parent=11 // pred_check
          %p266 = pneg %p158
        $region26: #{feed_forward.1} parent=11 // pred_check_branch
          %268 = sbr.rel (%p266) target = $region28
        $region27: #{feed_forward.1} parent=11 // pred_region
          %p269 = scmp.lt.s32.totalorder %s26, 0
          %s270 = scalar_select %p269, %s26, 0
          %s271 = scalar_lea.vmem %s4, %s270
        $region28: #{feed_forward.1} parent=11 // pred_fallthru
          _
        // Predicated region
        $region29: #{feed_forward.1} parent=11 // pred_check
          %p272 = pneg %p184
        $region30: #{feed_forward.1} parent=11 // pred_check_branch
          %274 = sbr.rel (%p272) target = $region32
        $region31: #{feed_forward.1} parent=11 // pred_region
          %s275 = smul.u32 16, %s26
          %p276 = scmp.lt.s32.totalorder %s275, 15
          %s277 = scalar_select %p276, %s275, 15
          %s278 = smul.addr %s277, 4
          %s279 = scalar_lea.vmem %s5, %s278
          %s280 = smul.u32 16, %s26
        $region32: #{feed_forward.1} parent=11 // pred_fallthru
          _
        // Predicated region
        $region33: #{feed_forward.1} parent=11 // pred_check
          %p281 = pneg %p205
        $region34: #{feed_forward.1} parent=11 // pred_check_branch
          %283 = sbr.rel (%p281) target = $region36
        $region35: #{feed_forward.1} parent=11 // pred_region
          _
        $region36: #{feed_forward.1} parent=11 // pred_fallthru
          _
      $region12: #{feed_forward.1} parent=5 // pred_fallthru
        _
      %p284 = scmp.lt.s32.totalorder %s16, 2
      // Predicated region
      $region37: #{feed_forward.1} parent=5 // pred_check
        %p285 = pneg %p284
      $region38: #{feed_forward.1} parent=5 // pred_check_branch
        %287 = sbr.rel (%p285) target = $region40
      $region39: #{feed_forward.1} parent=5 // pred_region
        // Predicated region
        $region41: #{feed_forward.1} parent=39 // pred_check
          %p288 = pneg %p48
        $region42: #{feed_forward.1} parent=39 // pred_check_branch
          %290 = sbr.rel (%p288) target = $region44
        $region43: #{feed_forward.1} parent=39 // pred_region
          %p291 = scmp.lt.s32.totalorder %s23, 1
          %s292 = scalar_select %p291, %s23, 1
          %s293 = smul.addr %s292, 4
          %s294 = scalar_lea.vmem %s0, %s293
        $region44: #{feed_forward.1} parent=39 // pred_fallthru
          _
      $region40: #{feed_forward.1} parent=5 // pred_fallthru
        _
      %p295 = scmp.le.s32.totalorder 1, %s16
      %p296 = scmp.lt.s32.totalorder %s16, 3
      %p297 = pnand %p295, %p296
      %p298 = pneg %p297
      // Predicated region
      $region45: #{feed_forward.1} parent=5 // pred_check
        _
      $region46: #{feed_forward.1} parent=5 // pred_check_branch
        %300 = sbr.rel (%p297) target = $region48
      $region47: #{feed_forward.1} parent=5 // pred_region
        %s301 = ssub.s32 %s16, 1
        %p302 = scmp.lt.s32.totalorder %s25, 1
        %s303 = scalar_select %p302, %s25, 1
        %s304 = smul.addr %s303, 4
        %s305 = scalar_lea.vmem %s0, %s304
        %p306 = pneg %p54
        %p307 = pneg %p51
        %p308 = scmp.lt.s32.totalorder %s26, 0
        %s309 = scalar_select %p308, %s26, 0
        %s310 = smul.addr %s309, 4
        %s311 = scalar_lea.vmem %s1, %s310
        %p312 = pneg %p80
        %p313 = pneg %p77
        %p314 = scmp.lt.s32.totalorder %s26, 0
        %s315 = scalar_select %p314, %s26, 0
        %s316 = smul.addr %s315, 4
        %s317 = scalar_lea.vmem %s2, %s316
        %p318 = pneg %p106
        %p319 = pneg %p103
        %p320 = scmp.lt.s32.totalorder %s26, 0
        %s321 = scalar_select %p320, %s26, 0
        %s322 = scalar_lea.vmem %s3, %s321
        %p323 = pneg %p132
        %p324 = pneg %p129
        %p325 = scmp.lt.s32.totalorder %s26, 0
        %s326 = scalar_select %p325, %s26, 0
        %s327 = scalar_lea.vmem %s4, %s326
        %p328 = pneg %p158
        %p329 = pneg %p155
        %s330 = smul.u32 16, %s26
        %p331 = scmp.lt.s32.totalorder %s330, 15
        %s332 = scalar_select %p331, %s330, 15
        %s333 = smul.addr %s332, 4
        %s334 = scalar_lea.vmem %s5, %s333
        %p335 = pneg %p184
        %p336 = pneg %p181
        %p337 = pneg %p205
        %p338 = pneg %p202
        %p339 = pneg %p231
        %p340 = pneg %p228
        %s341 = sand.u32 %s218, 1
        %s342 = scalar_lea.sflag [#allocation4], %s341
        %s343 = sand.u32 %s218, 1
        %s344 = smul.addr %s343, 8
        %s345 = scalar_lea.vmem [#allocation3], %s344
        %p346 = scmp.lt.s32.totalorder %s25, 1
        %s347 = scalar_select %p346, %s25, 1
        %s348 = smul.addr %s347, 4
        %s349 = scalar_lea.vmem %s0, %s348
        %p350 = scmp.lt.s32.totalorder %s26, 0
        %s351 = scalar_select %p350, %s26, 0
        %s352 = smul.addr %s351, 4
        %s353 = scalar_lea.vmem %s1, %s352
        %p354 = scmp.lt.s32.totalorder %s26, 0
        %s355 = scalar_select %p354, %s26, 0
        %s356 = smul.addr %s355, 4
        %s357 = scalar_lea.vmem %s2, %s356
        %p358 = scmp.lt.s32.totalorder %s26, 0
        %s359 = scalar_select %p358, %s26, 0
        %s360 = scalar_lea.vmem %s3, %s359
        %p361 = scmp.lt.s32.totalorder %s26, 0
        %s362 = scalar_select %p361, %s26, 0
        %s363 = scalar_lea.vmem %s4, %s362
        %s364 = smul.u32 16, %s26
        %p365 = scmp.lt.s32.totalorder %s364, 15
        %s366 = scalar_select %p365, %s364, 15
        %s367 = smul.addr %s366, 4
        %s368 = scalar_lea.vmem %s5, %s367
        %s369 = smul.u32 16, %s26
        %p371 = scmp.eq.s32.totalorder %s26, 0
        // Predicated region
        $region49: #{feed_forward.1} parent=47 // pred_check
          %p372 = pneg %p371
        $region50: #{feed_forward.1} parent=47 // pred_check_branch
          %374 = sbr.rel (%p372) target = $region52
        $region51: #{feed_forward.1} parent=47 // pred_region
          %v375 = vld [vmem:[%s6] sm:$0x1]
          %v377 = vlaneseq
          %v378 = vshrl.u32 %v377, 7
          %v379 = vsub.s32 0, %v378
          %v380 = vrot.slane %v375, %v379
          %382 = vst [vmem:[#allocation2] sm:$0xff] %v380
        $region52: #{feed_forward.1} parent=47 // pred_fallthru
          _
        %v383 = vld [vmem:[%s349] sm:$0xf]
        %v384 = vld [vmem:[%s353] sm:$0xf]
        %v385 = vld [vmem:[%s353 + $0x4] sm:$0xf]
        %v386 = vld [vmem:[%s353 + $0x8] sm:$0xf]
        %v387 = vld [vmem:[%s353 + $0xc] sm:$0xf]
        %v388 = vld [vmem:[%s353 + $0x10] sm:$0xf]
        %v389 = vld [vmem:[%s353 + $0x14] sm:$0xf]
        %v390 = vld [vmem:[%s353 + $0x18] sm:$0xf]
        %v391 = vld [vmem:[%s353 + $0x1c] sm:$0xf]
        %v392 = vld [vmem:[%s353 + $0x20] sm:$0xf]
        %v393 = vld [vmem:[%s353 + $0x24] sm:$0xf]
        %v394 = vld [vmem:[%s353 + $0x28] sm:$0xf]
        %v395 = vld [vmem:[%s353 + $0x2c] sm:$0xf]
        %v396 = vld [vmem:[%s353 + $0x30] sm:$0xf]
        %v397 = vld [vmem:[%s353 + $0x34] sm:$0xf]
        %v398 = vld [vmem:[%s353 + $0x38] sm:$0xf]
        %v399 = vld [vmem:[%s353 + $0x3c] sm:$0xf]
        %v400 = vld [vmem:[%s360] sm:$0x1]
        %v402 = vlaneseq
        %v403 = vshrl.u32 %v402, 7
        %v404 = vsub.s32 0, %v403
        %v405 = vrot.slane %v400, %v404
        %v423 = vunpack.c.l.b16 %v384
        %v424 = vunpack.c.l.b16 %v385
        %v425 = vunpack.c.l.b16 %v386
        %v426 = vunpack.c.l.b16 %v387
        %v427 = vunpack.c.l.b16 %v388
        %v428 = vunpack.c.l.b16 %v389
        %v429 = vunpack.c.l.b16 %v390
        %v430 = vunpack.c.l.b16 %v391
        %v431 = vunpack.c.l.b16 %v392
        %v432 = vunpack.c.l.b16 %v393
        %v433 = vunpack.c.l.b16 %v394
        %v434 = vunpack.c.l.b16 %v395
        %v435 = vunpack.c.l.b16 %v396
        %v436 = vunpack.c.l.b16 %v397
        %v437 = vunpack.c.l.b16 %v398
        %v438 = vunpack.c.l.b16 %v399
        %v439 = vpack.c.b16 %v424, %v423
        %v440 = vpack.c.b16 %v426, %v425
        %v441 = vpack.c.b16 %v428, %v427
        %v442 = vpack.c.b16 %v430, %v429
        %v443 = vpack.c.b16 %v432, %v431
        %v444 = vpack.c.b16 %v434, %v433
        %v445 = vpack.c.b16 %v436, %v435
        %v446 = vpack.c.b16 %v438, %v437
        %455 = vmatprep.subr.bf16.mxu0 0
        %456 = vmatpush1.bf16.msra.mxu0 %v446
        %457 = vmatprep.subr.bf16.mxu0 0
        %458 = vmatpush1.bf16.msra.mxu0 %v445
        %459 = vmatprep.subr.bf16.mxu0 0
        %460 = vmatpush1.bf16.msra.mxu0 %v444
        %461 = vmatprep.subr.bf16.mxu0 0
        %462 = vmatpush1.bf16.msra.mxu0 %v443
        %463 = vmatprep.subr.bf16.mxu0 0
        %464 = vmatpush1.bf16.msra.mxu0 %v442
        %465 = vmatprep.subr.bf16.mxu0 0
        %466 = vmatpush1.bf16.msra.mxu0 %v441
        %467 = vmatprep.subr.bf16.mxu0 0
        %468 = vmatpush1.bf16.msra.mxu0 %v440
        %469 = vmatprep.subr.bf16.mxu0 0
        %470 = vmatpush1.bf16.msra.mxu0 %v439
        %471 = vmatprep.subr.bf16.mxu0 0
        %472 = vmatpush2.bf16.msra.mxu0 0
        %473 = vmatprep.subr.bf16.mxu0 0
        %474 = vmatpush2.bf16.msra.mxu0 0
        %475 = vmatprep.subr.bf16.mxu0 0
        %476 = vmatpush2.bf16.msra.mxu0 0
        %477 = vmatprep.subr.bf16.mxu0 0
        %478 = vmatpush2.bf16.msra.mxu0 0
        %479 = vmatprep.subr.bf16.mxu0 0
        %480 = vmatpush2.bf16.msra.mxu0 0
        %481 = vmatprep.subr.bf16.mxu0 0
        %482 = vmatpush2.bf16.msra.mxu0 0
        %483 = vmatprep.subr.bf16.mxu0 0
        %484 = vmatpush2.bf16.msra.mxu0 0
        %485 = vmatprep.subr.bf16.mxu0 0
        %486 = vmatpush2.bf16.msra.mxu0 0
        %487 = vmatprep.mubr.bf16.mxu0 0
        %488 = vmatmul.mubr.bf16.gmra.mxu0 %v383
        %v489 = vpop.f32.mrf.mxu0
        %v490 = vadd.f32 %v405, %v489
        %v491 = vpop.f32.mrf.mxu0
        %v492 = vpop.f32.mrf.mxu0
        %v493 = vpop.f32.mrf.mxu0
        %494 = vdwg.mxu0
        %v495 = vld [vmem:[%s357] sm:$0xf]
        %v496 = vld [vmem:[%s357 + $0x4] sm:$0xf]
        %v497 = vld [vmem:[%s357 + $0x8] sm:$0xf]
        %v498 = vld [vmem:[%s357 + $0xc] sm:$0xf]
        %v499 = vld [vmem:[%s357 + $0x10] sm:$0xf]
        %v500 = vld [vmem:[%s357 + $0x14] sm:$0xf]
        %v501 = vld [vmem:[%s357 + $0x18] sm:$0xf]
        %v502 = vld [vmem:[%s357 + $0x1c] sm:$0xf]
        %v503 = vld [vmem:[%s357 + $0x20] sm:$0xf]
        %v504 = vld [vmem:[%s357 + $0x24] sm:$0xf]
        %v505 = vld [vmem:[%s357 + $0x28] sm:$0xf]
        %v506 = vld [vmem:[%s357 + $0x2c] sm:$0xf]
        %v507 = vld [vmem:[%s357 + $0x30] sm:$0xf]
        %v508 = vld [vmem:[%s357 + $0x34] sm:$0xf]
        %v509 = vld [vmem:[%s357 + $0x38] sm:$0xf]
        %v510 = vld [vmem:[%s357 + $0x3c] sm:$0xf]
        %v511 = vld [vmem:[%s363] sm:$0x1]
        %v513 = vlaneseq
        %v514 = vshrl.u32 %v513, 7
        %v515 = vsub.s32 0, %v514
        %v516 = vrot.slane %v511, %v515
        %v534 = vunpack.c.l.b16 %v495
        %v535 = vunpack.c.l.b16 %v496
        %v536 = vunpack.c.l.b16 %v497
        %v537 = vunpack.c.l.b16 %v498
        %v538 = vunpack.c.l.b16 %v499
        %v539 = vunpack.c.l.b16 %v500
        %v540 = vunpack.c.l.b16 %v501
        %v541 = vunpack.c.l.b16 %v502
        %v542 = vunpack.c.l.b16 %v503
        %v543 = vunpack.c.l.b16 %v504
        %v544 = vunpack.c.l.b16 %v505
        %v545 = vunpack.c.l.b16 %v506
        %v546 = vunpack.c.l.b16 %v507
        %v547 = vunpack.c.l.b16 %v508
        %v548 = vunpack.c.l.b16 %v509
        %v549 = vunpack.c.l.b16 %v510
        %v550 = vpack.c.b16 %v535, %v534
        %v551 = vpack.c.b16 %v537, %v536
        %v552 = vpack.c.b16 %v539, %v538
        %v553 = vpack.c.b16 %v541, %v540
        %v554 = vpack.c.b16 %v543, %v542
        %v555 = vpack.c.b16 %v545, %v544
        %v556 = vpack.c.b16 %v547, %v546
        %v557 = vpack.c.b16 %v549, %v548
        %566 = vmatprep.subr.bf16.mxu0 0
        %567 = vmatpush1.bf16.msra.mxu0 %v557
        %568 = vmatprep.subr.bf16.mxu0 0
        %569 = vmatpush1.bf16.msra.mxu0 %v556
        %570 = vmatprep.subr.bf16.mxu0 0
        %571 = vmatpush1.bf16.msra.mxu0 %v555
        %572 = vmatprep.subr.bf16.mxu0 0
        %573 = vmatpush1.bf16.msra.mxu0 %v554
        %574 = vmatprep.subr.bf16.mxu0 0
        %575 = vmatpush1.bf16.msra.mxu0 %v553
        %576 = vmatprep.subr.bf16.mxu0 0
        %577 = vmatpush1.bf16.msra.mxu0 %v552
        %578 = vmatprep.subr.bf16.mxu0 0
        %579 = vmatpush1.bf16.msra.mxu0 %v551
        %580 = vmatprep.subr.bf16.mxu0 0
        %581 = vmatpush1.bf16.msra.mxu0 %v550
        %582 = vmatprep.subr.bf16.mxu0 0
        %583 = vmatpush2.bf16.msra.mxu0 0
        %584 = vmatprep.subr.bf16.mxu0 0
        %585 = vmatpush2.bf16.msra.mxu0 0
        %586 = vmatprep.subr.bf16.mxu0 0
        %587 = vmatpush2.bf16.msra.mxu0 0
        %588 = vmatprep.subr.bf16.mxu0 0
        %589 = vmatpush2.bf16.msra.mxu0 0
        %590 = vmatprep.subr.bf16.mxu0 0
        %591 = vmatpush2.bf16.msra.mxu0 0
        %592 = vmatprep.subr.bf16.mxu0 0
        %593 = vmatpush2.bf16.msra.mxu0 0
        %594 = vmatprep.subr.bf16.mxu0 0
        %595 = vmatpush2.bf16.msra.mxu0 0
        %596 = vmatprep.subr.bf16.mxu0 0
        %597 = vmatpush2.bf16.msra.mxu0 0
        %598 = vmatprep.mubr.bf16.mxu0 0
        %599 = vmatmul.mubr.bf16.gmra.mxu0 %v383
        %v600 = vpop.f32.mrf.mxu0
        %v601 = vadd.f32 %v516, %v600
        %v602 = vpop.f32.mrf.mxu0
        %v603 = vpop.f32.mrf.mxu0
        %v604 = vpop.f32.mrf.mxu0
        %605 = vdwg.mxu0
        %v606 = vmul.f32 %v601, 0.5
        %v607 = vmul.f32 %v601, 0.70710677
        %v608 = verf.f32.pop %v607
        %v609 = vadd.f32 %v608, 1.0
        %v610 = vmul.f32 %v606, %v609
        %v611 = vmul.f32 %v490, %v610
        %v612 = vpack.c.bf16 %v611, %v611
        %v613 = vld [vmem:[#allocation2] sm:$0xff]
        %v614 = vld [vmem:[%s368] sm:$0xf]
        %v615 = vld [vmem:[%s368 + $0x4] sm:$0xf]
        %v616 = vld [vmem:[%s368 + $0x8] sm:$0xf]
        %v617 = vld [vmem:[%s368 + $0xc] sm:$0xf]
        %v618 = vld [vmem:[%s368 + $0x10] sm:$0xf]
        %v619 = vld [vmem:[%s368 + $0x14] sm:$0xf]
        %v620 = vld [vmem:[%s368 + $0x18] sm:$0xf]
        %v621 = vld [vmem:[%s368 + $0x1c] sm:$0xf]
        %v622 = vld [vmem:[%s368 + $0x20] sm:$0xf]
        %v623 = vld [vmem:[%s368 + $0x24] sm:$0xf]
        %v624 = vld [vmem:[%s368 + $0x28] sm:$0xf]
        %v625 = vld [vmem:[%s368 + $0x2c] sm:$0xf]
        %v626 = vld [vmem:[%s368 + $0x30] sm:$0xf]
        %v627 = vld [vmem:[%s368 + $0x34] sm:$0xf]
        %v628 = vld [vmem:[%s368 + $0x38] sm:$0xf]
        %v629 = vld [vmem:[%s368 + $0x3c] sm:$0xf]
        %v646 = vunpack.c.l.b16 %v614
        %v647 = vunpack.c.l.b16 %v615
        %v648 = vunpack.c.l.b16 %v616
        %v649 = vunpack.c.l.b16 %v617
        %v650 = vunpack.c.l.b16 %v618
        %v651 = vunpack.c.l.b16 %v619
        %v652 = vunpack.c.l.b16 %v620
        %v653 = vunpack.c.l.b16 %v621
        %v654 = vunpack.c.l.b16 %v622
        %v655 = vunpack.c.l.b16 %v623
        %v656 = vunpack.c.l.b16 %v624
        %v657 = vunpack.c.l.b16 %v625
        %v658 = vunpack.c.l.b16 %v626
        %v659 = vunpack.c.l.b16 %v627
        %v660 = vunpack.c.l.b16 %v628
        %v661 = vunpack.c.l.b16 %v629
        %v662 = vpack.c.b16 %v647, %v646
        %v663 = vpack.c.b16 %v649, %v648
        %v664 = vpack.c.b16 %v651, %v650
        %v665 = vpack.c.b16 %v653, %v652
        %v666 = vpack.c.b16 %v655, %v654
        %v667 = vpack.c.b16 %v657, %v656
        %v668 = vpack.c.b16 %v659, %v658
        %v669 = vpack.c.b16 %v661, %v660
        %678 = vmatprep.subr.bf16.mxu0 0
        %679 = vmatpush1.bf16.msra.mxu0 %v669
        %680 = vmatprep.subr.bf16.mxu0 0
        %681 = vmatpush1.bf16.msra.mxu0 %v668
        %682 = vmatprep.subr.bf16.mxu0 0
        %683 = vmatpush1.bf16.msra.mxu0 %v667
        %684 = vmatprep.subr.bf16.mxu0 0
        %685 = vmatpush1.bf16.msra.mxu0 %v666
        %686 = vmatprep.subr.bf16.mxu0 0
        %687 = vmatpush1.bf16.msra.mxu0 %v665
        %688 = vmatprep.subr.bf16.mxu0 0
        %689 = vmatpush1.bf16.msra.mxu0 %v664
        %690 = vmatprep.subr.bf16.mxu0 0
        %691 = vmatpush1.bf16.msra.mxu0 %v663
        %692 = vmatprep.subr.bf16.mxu0 0
        %693 = vmatpush1.bf16.msra.mxu0 %v662
        %694 = vmatprep.subr.bf16.mxu0 0
        %695 = vmatpush2.bf16.msra.mxu0 0
        %696 = vmatprep.subr.bf16.mxu0 0
        %697 = vmatpush2.bf16.msra.mxu0 0
        %698 = vmatprep.subr.bf16.mxu0 0
        %699 = vmatpush2.bf16.msra.mxu0 0
        %700 = vmatprep.subr.bf16.mxu0 0
        %701 = vmatpush2.bf16.msra.mxu0 0
        %702 = vmatprep.subr.bf16.mxu0 0
        %703 = vmatpush2.bf16.msra.mxu0 0
        %704 = vmatprep.subr.bf16.mxu0 0
        %705 = vmatpush2.bf16.msra.mxu0 0
        %706 = vmatprep.subr.bf16.mxu0 0
        %707 = vmatpush2.bf16.msra.mxu0 0
        %708 = vmatprep.subr.bf16.mxu0 0
        %709 = vmatpush2.bf16.msra.mxu0 0
        %710 = vmatprep.mubr.bf16.mxu0 0
        %711 = vmatmul.mubr.bf16.gmra.mxu0 %v612
        %v712 = vpop.f32.mrf.mxu0
        %v713 = vadd.f32 0.0, %v712
        %v714 = vpop.f32.mrf.mxu0
        %v715 = vpop.f32.mrf.mxu0
        %v716 = vpop.f32.mrf.mxu0
        %717 = vdwg.mxu0
        %v718 = vadd.f32 %v613, %v713
        %719 = vst [vmem:[#allocation2] sm:$0xff] %v718
        // Predicated region
        $region53: #{feed_forward.1} parent=47 // pred_check
          %p720 = pneg %p371
        $region54: #{feed_forward.1} parent=47 // pred_check_branch
          %722 = sbr.rel (%p720) target = $region56
        $region55: #{feed_forward.1} parent=47 // pred_region
          %v723 = vld [vmem:[#allocation2] sm:$0xff]
          %724 = vst [vmem:[%s345] sm:$0xff] %v723
        $region56: #{feed_forward.1} parent=47 // pred_fallthru
          _
        %s725 = sand.u32 %s218, 1
        %s726 = scalar_lea.sflag [#allocation4], %s725
        %s727 = sand.u32 %s218, 1
        %s728 = smul.addr %s727, 8
        %s729 = scalar_lea.vmem [#allocation3], %s728
        // Predicated region
        $region57: #{feed_forward.1} parent=47 // pred_check
          %p730 = pneg %p228
        $region58: #{feed_forward.1} parent=47 // pred_check_branch
          %732 = sbr.rel (%p730) target = $region60
        $region59: #{feed_forward.1} parent=47 // pred_region
          %s734 = ssub.s32 128, 128
          %735 = vsyncadd %s726, %s734
          %s736 = smul.addr %s25, 128
          %s737 = scalar_lea.hbm %s7, %s736
          %s739 = sshll.u32 %s729, 4
          %s740 = int_to_ptr.vmem [resolvable:$true] %s739
          %742 = dma.vmem_to_hbm [thread:$0]  %s740, 128, %s737, %s726
        $region60: #{feed_forward.1} parent=47 // pred_fallthru
          _
      $region48: #{feed_forward.1} parent=5 // pred_fallthru
        _
      %p743 = scmp.le.s32.totalorder 2, %s16
      // Predicated region
      $region61: #{feed_forward.1} parent=5 // pred_check
        %p744 = pneg %p743
      $region62: #{feed_forward.1} parent=5 // pred_check_branch
        %746 = sbr.rel (%p744) target = $region64
      $region63: #{feed_forward.1} parent=5 // pred_region
        %s747 = ssub.s32 %s16, 2
        // Predicated region
        $region65: #{feed_forward.1} parent=63 // pred_check
          %p748 = pneg %p234
        $region66: #{feed_forward.1} parent=63 // pred_check_branch
          %750 = sbr.rel (%p748) target = $region68
        $region67: #{feed_forward.1} parent=63 // pred_region
          %s751 = sand.u32 %s219, 1
          %s752 = scalar_lea.sflag [#allocation4], %s751
          %s753 = sand.u32 %s219, 1
          %s754 = smul.addr %s753, 8
          %s755 = scalar_lea.vmem [#allocation3], %s754
          %756 = dma.done %s752, 128
        $region68: #{feed_forward.1} parent=63 // pred_fallthru
          _
      $region64: #{feed_forward.1} parent=5 // pred_fallthru
        _
    $region6: #{feed_forward.1} parent=1 // loop_footer
      %s20 = sadd.s32 1, %s16
    $region7: #{feed_forward.1} parent=1 // loop_footer_branch
      %15 = sbr.rel target = $region3
    $region8: #{feed_forward.1} parent=1 // loop_exit
      _
    %757 = vsyncpa [#allocation4], 1
    %s758 = scalar_lea.sflag [#allocation4], 1
    %759 = vsyncpa %s758, 1

</llo_original>
